<compile_context>
chip_gen: v7x
topology: tpu7x:2x2x1
jax: 0.10.0
libtpu: 0.0.40
codegen_flags: <defaults>
</compile_context>

<pallas_src>
import functools
import math

import jax
import jax.numpy as jnp
from jax.experimental import pallas as pl
from jax.experimental.pallas import tpu as pltpu


def _layernorm_kernel(x_ref, alpha_ref, bias_ref, o_ref, *, eps):
    # x_ref: (TM, D) row tile in VMEM; alpha_ref/bias_ref: (1,) scalars in SMEM.
    x = x_ref[...]
    d = x.shape[-1]

    # Row reductions accumulated in f32 (works for f32 / bf16 inputs alike).
    mean = jnp.sum(x, axis=-1, keepdims=True, dtype=jnp.float32) * (1.0 / d)
    xc = x.astype(jnp.float32) - mean

    # torch.Tensor.std defaults to the unbiased estimator (divide by N - 1).
    inv_nm1 = 1.0 / max(d - 1, 1)          # guard d == 1 (trace-time constant)
    var = jnp.sum(xc * xc, axis=-1, keepdims=True) * inv_nm1
    std = jnp.sqrt(var)

    alpha = alpha_ref[0]
    bias = bias_ref[0]

    # (TM, 1) column: reciprocal goes to the EUP slot, fused scale into one
    # (TM, D) multiply + add on the VPU.  Spec divides by (std + eps), NOT
    # sqrt(var + eps).
    scale = alpha * pl.reciprocal(std + eps, approx=False)
    o_ref[...] = (xc * scale + bias).astype(o_ref.dtype)


def layer_norm(x, alpha, bias, *, eps=1e-6, target_block_bytes=2 * 1024 * 1024):
    """x: (..., D). alpha, bias: scalar parameters (shape (1,) in the module)."""
    orig_shape = x.shape
    d = orig_shape[-1]
    m = math.prod(orig_shape[:-1]) if len(orig_shape) > 1 else 1
    x2d = x.reshape(m, d)

    # Row tile sized so one block is ~target_block_bytes of f32 working set
    # (in-kernel temps are f32 even for narrow inputs).  Resident set is
    # roughly 2x in + 2x out + a few f32 temps ~= 6-7 blocks, which stays well
    # inside the 32 MiB scoped-VMEM limit requested below on every generation
    # (v5e default is only 16 MiB, hence the explicit limit).
    bytes_per_row_f32 = d * 4
    tm = max(8, target_block_bytes // bytes_per_row_f32)
    tm = min(tm, 8192)
    tm = max(8, (tm // 8) * 8)                 # sublane-aligned
    m_ceil = ((m + 7) // 8) * 8
    tm = min(tm, m_ceil)                       # never bigger than (padded) M

    grid = (pl.cdiv(m, tm),)                   # ragged last block is fine

    alpha1d = jnp.asarray(alpha, jnp.float32).reshape(1)
    bias1d = jnp.asarray(bias, jnp.float32).reshape(1)

    itemsize = jnp.dtype(x.dtype).itemsize
    cost = pl.CostEstimate(
        flops=7 * m * d,                       # 2 reductions + center + square + scale + add
        transcendentals=2 * m,                 # sqrt + reciprocal per row
        bytes_accessed=2 * m * d * itemsize,   # read x, write out
    )

    kernel = functools.partial(_layernorm_kernel, eps=float(eps))

    out = pl.pallas_call(
        kernel,
        out_shape=jax.ShapeDtypeStruct((m, d), x.dtype),
        grid_spec=pltpu.PrefetchScalarGridSpec(
            num_scalar_prefetch=0,
            grid=grid,
            in_specs=[
                pl.BlockSpec((tm, d), lambda i: (i, 0)),                # x tile (pipelined)
                pl.BlockSpec(memory_space=pltpu.MemorySpace.SMEM),      # alpha (scalar)
                pl.BlockSpec(memory_space=pltpu.MemorySpace.SMEM),      # bias  (scalar)
            ],
            out_specs=pl.BlockSpec((tm, d), lambda i: (i, 0)),
        ),
        compiler_params=pltpu.CompilerParams(
            # Row tiles are fully independent -> shard grid steps across TCs.
            dimension_semantics=("parallel",),
            # 32 MiB scoped VMEM: raises v5e's 16 MiB default, matches the
            # v6e/v7x default, and stays under v7x's 64 MiB physical VMEM.
            vmem_limit_bytes=32 * 1024 * 1024,
        ),
        cost_estimate=cost,
    )(x2d, alpha1d, bias1d)

    return out.reshape(orig_shape)


if __name__ == "__main__":
    # Small shapes consistent with the module (normalize over the last axis).
    batch, seq, hidden = 2, 8, 128
    eps = 1e-6

    key = jax.random.PRNGKey(0)
    kx, ka, kb = jax.random.split(key, 3)
    x = jax.random.normal(kx, (batch, seq, hidden), dtype=jnp.float32)
    # Module default init is alpha=1, bias=0; use non-trivial scalars to
    # exercise the parameter path (forward semantics unchanged).
    alpha = jax.random.normal(ka, (1,), dtype=jnp.float32)
    bias = jax.random.normal(kb, (1,), dtype=jnp.float32)

    out = layer_norm(x, alpha, bias, eps=eps)
    jax.block_until_ready(out)

    # Pure-JAX reference matching the PyTorch forward (unbiased std, eps added
    # to std, scalar affine).
    mean = jnp.mean(x, axis=-1, keepdims=True)
    std = jnp.std(x, axis=-1, keepdims=True, ddof=1)
    ref = alpha * (x - mean) / (std + eps) + bias

    assert out.shape == x.shape
    assert jnp.allclose(out, ref, atol=1e-5, rtol=1e-5), "mismatch vs reference"

    print("KERNEL_OK")
</pallas_src>

<mosaic_0001>
module attributes {stable_mosaic.version = 11 : i64} {
  func.func @_layernorm_kernel(%arg0: i32, %arg1: memref<16x128xf32, #tpu.memory_space<vmem>>, %arg2: memref<1xf32, #tpu.memory_space<smem>>, %arg3: memref<1xf32, #tpu.memory_space<smem>>, %arg4: memref<16x128xf32, #tpu.memory_space<vmem>>) attributes {dimension_semantics = [#tpu.dimension_semantics<parallel>], iteration_bounds = array<i64: 1>, scalar_prefetch = 0 : i64, scratch_operands = 0 : i64, tpu.core_type = #tpu.core_type<tc>, window_params = [{transform_indices = @transform_0, window_bounds = array<i64: 16, 128>}, {transform_indices = @transform_1, window_bounds = array<i64: 1>}, {transform_indices = @transform_2, window_bounds = array<i64: 1>}, {transform_indices = @transform_3, window_bounds = array<i64: 16, 128>}]} {
    %c0 = arith.constant 0 : index
    %c0_0 = arith.constant 0 : index
    %0 = vector.load %arg1[%c0, %c0_0] : memref<16x128xf32, #tpu.memory_space<vmem>>, vector<16x128xf32>
    %cst = arith.constant dense<0.000000e+00> : vector<16xf32>
    %1 = vector.multi_reduction <add>, %0, %cst [1] : vector<16x128xf32> to vector<16xf32>
    %2 = vector.shape_cast %1 : vector<16xf32> to vector<16x1xf32>
    %cst_1 = arith.constant 7.812500e-03 : f32
    %3 = vector.broadcast %cst_1 : f32 to vector<16x1xf32>
    %4 = arith.mulf %2, %3 : vector<16x1xf32>
    %5 = vector.broadcast %4 : vector<16x1xf32> to vector<16x128xf32>
    %6 = arith.subf %0, %5 : vector<16x128xf32>
    %7 = arith.mulf %6, %6 : vector<16x128xf32>
    %cst_2 = arith.constant dense<0.000000e+00> : vector<16xf32>
    %8 = vector.multi_reduction <add>, %7, %cst_2 [1] : vector<16x128xf32> to vector<16xf32>
    %9 = vector.shape_cast %8 : vector<16xf32> to vector<16x1xf32>
    %cst_3 = arith.constant 0.00787401571 : f32
    %10 = vector.broadcast %cst_3 : f32 to vector<16x1xf32>
    %11 = arith.mulf %9, %10 : vector<16x1xf32>
    %12 = math.sqrt %11 : vector<16x1xf32>
    %c0_4 = arith.constant 0 : index
    %13 = memref.load %arg2[%c0_4] : memref<1xf32, #tpu.memory_space<smem>>
    %c0_5 = arith.constant 0 : index
    %14 = memref.load %arg3[%c0_5] : memref<1xf32, #tpu.memory_space<smem>>
    %cst_6 = arith.constant 9.99999997E-7 : f32
    %15 = vector.broadcast %cst_6 : f32 to vector<16x1xf32>
    %16 = arith.addf %12, %15 : vector<16x1xf32>
    %17 = tpu.reciprocal %16 : vector<16x1xf32> -> vector<16x1xf32>
    %18 = vector.broadcast %13 : f32 to vector<16x1xf32>
    %19 = arith.mulf %18, %17 : vector<16x1xf32>
    %20 = vector.broadcast %19 : vector<16x1xf32> to vector<16x128xf32>
    %21 = arith.mulf %6, %20 : vector<16x128xf32>
    %22 = vector.broadcast %14 : f32 to vector<16x128xf32>
    %23 = arith.addf %21, %22 : vector<16x128xf32>
    %c0_7 = arith.constant 0 : index
    %c0_8 = arith.constant 0 : index
    %24 = vector.load %arg4[%c0_7, %c0_8] : memref<16x128xf32, #tpu.memory_space<vmem>>, vector<16x128xf32>
    tpu.vector_store %arg4[%c0_7, %c0_8], %23 {strides = array<i32>} : memref<16x128xf32, #tpu.memory_space<vmem>>, vector<16x128xf32>,
    return
  }
  func.func @transform_0(%arg0: i32) -> (i32, i32) {
    %c0_i32 = arith.constant 0 : i32
    %c0_i32_0 = arith.constant 0 : i32
    return %arg0, %c0_i32 : i32, i32
  }
  func.func @transform_1(%arg0: i32) -> i32 {
    %c0_i32 = arith.constant 0 : i32
    %c0_i32_0 = arith.constant 0 : i32
    return %c0_i32 : i32
  }
  func.func @transform_2(%arg0: i32) -> i32 {
    %c0_i32 = arith.constant 0 : i32
    %c0_i32_0 = arith.constant 0 : i32
    return %c0_i32 : i32
  }
  func.func @transform_3(%arg0: i32) -> (i32, i32) {
    %c0_i32 = arith.constant 0 : i32
    %c0_i32_0 = arith.constant 0 : i32
    return %arg0, %c0_i32 : i32, i32
  }
}

</mosaic_0001>

<llo_original>
// kernel: tpu_custom_call.1
$region0: #{tpu_custom_call.1}
  #allocation0 [shape = 'u32[]', space=smem, size = 0x4, offset = 0x4, fixed_abs, tag = 'smem constant byte address 0x4 - core index']
  #allocation1 [shape = 'u32[144,128]{1,0:T(1,128)}', space=vmem, size = 0x12000, scoped, tag = 'internal scratch']
  #allocation2 [shape = 'f32[1]{0:T(128)S(6)}', space=smem, size = 0x200, scoped, tag = 'scoped memory for tpu_custom_call.1']
  #allocation3 [shape = 'f32[1]{0:T(128)S(6)}', space=smem, size = 0x200, scoped, tag = 'scoped memory for tpu_custom_call.1']
  %s0 = inlined_call_operand.hbm [shape: f32[16,128], index: 0, kind: input, shape index: {}]
  %s1 = inlined_call_operand.<no memory space> [shape: f32[1], index: 1, kind: input, shape index: {}]
  %s2 = inlined_call_operand.<no memory space> [shape: f32[1], index: 2, kind: input, shape index: {}]
  %s3 = inlined_call_operand.hbm [shape: f32[16,128], index: 3, kind: output, shape index: {}]
  %s4 = sld [smem:[#allocation0]]
  $region26: #{tpu_custom_call.1} parent=0
    _
  %s6 = ssub.s32 1, %s4
  %s7 = scalar_select 0, %s6, %s4
  %8 = sst [smem:[#allocation2]] %s1
  %9 = sst [smem:[#allocation3]] %s2
  $region1: #{tpu_custom_call.1} parent=0
    #allocation4 [shape = 'u8[8192]{0}', space=vmem, size = 0x2000, scoped, tag = 'input window, operand 0, single buffered']
    #allocation5 [shape = 's32[1]{0}', space=sflag, size = 0x4, scoped, tag = 'scoped memory for tpu_custom_call.1']
    #allocation6 [shape = 's32[1]{0}', space=sflag, size = 0x4, scoped, tag = 'scoped memory for tpu_custom_call.1']
    #allocation7 [shape = 'u8[8192]{0}', space=vmem, size = 0x2000, scoped, tag = 'output window, operand 0, single buffered']
    %10 = vsyncpa [#allocation5], 0
    %11 = vsyncpa [#allocation6], 0
    // Predicated region
    $region2: #{tpu_custom_call.1} parent=1 // pred_check
      _
    $region3: #{tpu_custom_call.1} parent=1 // pred_check_branch
      %13 = sbr.rel (0) target = $region5
    $region4: #{tpu_custom_call.1} parent=1 // pred_region
      %s15 = ssub.s32 256, 256
      %16 = vsyncadd [#allocation5], %s15
      %s17 = sshll.u32 [#allocation4], 4
      %s18 = int_to_ptr.vmem [resolvable:$true] %s17
      %23 = dma.hbm_to_vmem [thread:$0]  %s0, 256, %s18, [#allocation5], 128, 128, 8
    $region5: #{tpu_custom_call.1} parent=1 // pred_fallthru
      _
    // Predicated region
    $region6: #{tpu_custom_call.1} parent=1 // pred_check
      _
    $region7: #{tpu_custom_call.1} parent=1 // pred_check_branch
      %25 = sbr.rel (0) target = $region9
    $region8: #{tpu_custom_call.1} parent=1 // pred_region
      _
    $region9: #{tpu_custom_call.1} parent=1 // pred_fallthru
      _
    // Predicated region
    $region10: #{tpu_custom_call.1} parent=1 // pred_check
      _
    $region11: #{tpu_custom_call.1} parent=1 // pred_check_branch
      %27 = sbr.rel (0) target = $region13
    $region12: #{tpu_custom_call.1} parent=1 // pred_region
      _
    $region13: #{tpu_custom_call.1} parent=1 // pred_fallthru
      _
    // Predicated region
    $region14: #{tpu_custom_call.1} parent=1 // pred_check
      _
    $region15: #{tpu_custom_call.1} parent=1 // pred_check_branch
      %29 = sbr.rel (0) target = $region17
    $region16: #{tpu_custom_call.1} parent=1 // pred_region
      %30 = dma.done [#allocation5], 256
    $region17: #{tpu_custom_call.1} parent=1 // pred_fallthru
      _
    %v31 = vld [vmem:[#allocation4] sm:$0xff]
    %v32 = vld [vmem:[#allocation4 + $0x8] sm:$0xff]
    %33 = vadd.xlane.f32.xlu0 %v31
    %v34 = vpop.xlane.xlu0 %33
    %35 = vadd.xlane.f32.xlu0 %v32
    %v36 = vpop.xlane.xlu0 %35
    %v37 = vmul.f32 %v34, 0.0078125
    %v38 = vmul.f32 %v36, 0.0078125
    %v39 = vsub.f32 %v31, %v37
    %v40 = vsub.f32 %v32, %v38
    %v41 = vmul.f32 %v39, %v39
    %v42 = vmul.f32 %v40, %v40
    %43 = vadd.xlane.f32.xlu0 %v41
    %v44 = vpop.xlane.xlu0 %43
    %45 = vadd.xlane.f32.xlu0 %v42
    %v46 = vpop.xlane.xlu0 %45
    %v47 = vmul.f32 %v44, 0.007874016
    %v48 = vmul.f32 %v46, 0.007874016
    %v49 = vrsqrt.pop %v47
    %v50 = vmul.f32 %v47, %v49
    %vm51 = vcmp.eq.f32.partialorder %v47, inf
    %v52 = vsel %vm51, %v47, %v50
    %vm53 = vcmp.eq.f32.partialorder %v47, 0.0
    %v54 = vand.u32 %v47, 2147483648
    %v55 = vsel %vm53, %v54, %v52
    %v56 = vrsqrt.pop %v48
    %v57 = vmul.f32 %v48, %v56
    %vm58 = vcmp.eq.f32.partialorder %v48, inf
    %v59 = vsel %vm58, %v48, %v57
    %vm60 = vcmp.eq.f32.partialorder %v48, 0.0
    %v61 = vand.u32 %v48, 2147483648
    %v62 = vsel %vm60, %v61, %v59
    %s63 = sld [smem:[#allocation2]]
    %s64 = sld [smem:[#allocation3]]
    %v65 = vadd.f32 %v55, 1e-06
    %v66 = vadd.f32 %v62, 1e-06
    %v67 = vrcp.pop %v65
    %v68 = vrcp.pop %v66
    %v69 = vstv %s63
    %v70 = vmul.f32 %v69, %v67
    %v71 = vmul.f32 %v69, %v68
    %v72 = vmul.f32 %v39, %v70
    %v73 = vmul.f32 %v40, %v71
    %v74 = vstv %s64
    %v75 = vadd.f32 %v72, %v74
    %v76 = vadd.f32 %v73, %v74
    %77 = vst [vmem:[#allocation7] sm:$0xff] %v75
    %78 = vst [vmem:[#allocation7 + $0x8] sm:$0xff] %v76
    // Predicated region
    $region18: #{tpu_custom_call.1} parent=1 // pred_check
      _
    $region19: #{tpu_custom_call.1} parent=1 // pred_check_branch
      %80 = sbr.rel (0) target = $region21
    $region20: #{tpu_custom_call.1} parent=1 // pred_region
      %s82 = ssub.s32 256, 256
      %83 = vsyncadd [#allocation6], %s82
      %s84 = sshll.u32 [#allocation7], 4
      %s85 = int_to_ptr.vmem [resolvable:$true] %s84
      %90 = dma.vmem_to_hbm [thread:$0]  %s85, 256, %s3, [#allocation6], 128, 128, 8
    $region21: #{tpu_custom_call.1} parent=1 // pred_fallthru
      _
    // Predicated region
    $region22: #{tpu_custom_call.1} parent=1 // pred_check
      _
    $region23: #{tpu_custom_call.1} parent=1 // pred_check_branch
      %92 = sbr.rel (0) target = $region25
    $region24: #{tpu_custom_call.1} parent=1 // pred_region
      %93 = dma.done [#allocation6], 256
    $region25: #{tpu_custom_call.1} parent=1 // pred_fallthru
      _
    %94 = vsyncpa [#allocation5], 1
    %95 = vsyncpa [#allocation6], 1

</llo_original>
